<compile_context>
chip_gen: v7x
topology: tpu7x:2x2x1
jax: 0.10.0
libtpu: 0.0.40
codegen_flags: <defaults>
</compile_context>

<pallas_src>
import math

import jax
import jax.numpy as jnp
from jax.experimental import pallas as pl
from jax.experimental.pallas import tpu as pltpu


def _round_up(x, m):
    return ((x + m - 1) // m) * m


# --------------------------------------------------------------------------- #
# Kernel                                                                      #
# --------------------------------------------------------------------------- #
def _make_gated_agg_kernel(Sp, E, lane_dense):
    """Sp: sublane-padded sequence length, E: embedding size."""

    def kernel(adj_ref, x_ref, w_in_ref, w_out_ref, b_ref, o_ref):
        BT = x_ref.shape[0]

        if lane_dense:
            # Lane-dense blocks -> logical shapes (relayout hidden under DMA).
            x2 = x_ref[...].reshape(BT * Sp, E)            # (BT*Sp, E)
            adj = adj_ref[...].reshape(BT, Sp, 2 * Sp)     # [adj_in | adj_out]
        else:
            x2 = x_ref[...].reshape(BT * Sp, E)            # leading-dim merge
            adj = adj_ref[...]                             # (BT, Sp, 2Sp)

        # Weight stage: two (E,E) fused weights against the same resident x
        # tile (no intra-vreg lane slice of a packed (E,2E) result).
        xw_in = jnp.dot(x2, w_in_ref[...], preferred_element_type=jnp.float32)
        xw_out = jnp.dot(x2, w_out_ref[...], preferred_element_type=jnp.float32)
        # Tile-aligned sublane concat (Sp % 8 == 0): (BT, 2*Sp, E).
        xw_cat = jnp.concatenate(
            [xw_in.reshape(BT, Sp, E), xw_out.reshape(BT, Sp, E)], axis=1)
        xw_cat = xw_cat.astype(adj.dtype)   # keeps the MXU in bf16 on that path

        # Single fused adjacency contraction (K = 2*Sp) + one bias add.
        emb = jnp.einsum('bij,bje->bie', adj, xw_cat,
                         preferred_element_type=jnp.float32) + b_ref[...]

        if lane_dense:
            o_ref[...] = emb.reshape(BT, Sp * E).astype(o_ref.dtype)
        else:
            o_ref[...] = emb.astype(o_ref.dtype)

    return kernel


# --------------------------------------------------------------------------- #
# VMEM budgeting                                                              #
# --------------------------------------------------------------------------- #
def _step_vmem_bytes(bt, Sp, E, itemsize, lane_dense):
    """Padded per-grid-step VMEM footprint: double-buffered blocks plus the
    f32 in-kernel temporaries (adj/x relayouts, xw_in/out, xw_cat, emb)."""
    e_l = _round_up(E, 128)
    s2_l = _round_up(2 * Sp, 128)
    if lane_dense:
        rows = _round_up(bt, 8)
        adj_blk = rows * _round_up(2 * Sp * Sp, 128)
        x_blk = rows * _round_up(Sp * E, 128)
    else:
        adj_blk = bt * Sp * s2_l            # Sp is already a multiple of 8
        x_blk = bt * Sp * e_l
    out_blk = x_blk
    blocks = 2 * (adj_blk + x_blk + out_blk) * itemsize      # double-buffered
    srows = bt * Sp
    inter = 4 * srows * (s2_l + 6 * e_l)                      # f32 temporaries
    return blocks + inter


def _pick_block_batch(Bp, Sp, E, itemsize, budget_bytes, lane_dense):
    """Largest multiple-of-8 divisor of the padded batch whose padded per-step
    footprint fits the budget, keeping grid = Bp//BT >= 2 (v7x megacore)
    whenever the batch is large enough to split."""
    best = 8
    for d in range(8, Bp + 1, 8):
        if Bp % d:
            continue
        if Bp >= 16 and Bp // d < 2:
            continue
        if _step_vmem_bytes(d, Sp, E, itemsize, lane_dense) <= budget_bytes:
            best = max(best, d)
    return best


def _vmem_capacity_bytes():
    try:
        return int(pltpu.get_tpu_info().vmem_capacity_bytes)
    except Exception:
        return 64 * 1024 * 1024             # conservative: v7x per-core VMEM


# --------------------------------------------------------------------------- #
# Wrapper                                                                     #
# --------------------------------------------------------------------------- #
def gated_agg(item_seq_emb, adj_in, adj_out, params, *,
              block_batch=None, lane_dense=True, use_bf16=False):
    """GatedAgg forward.

    item_seq_emb: [B, S, E]; adj_in / adj_out: [B, S, S].
    params: (w_in, b_in, w_out, b_out, wf_in, wf_out, b_f); weights stored as
    (in, out) so the math is x @ W; final_linear's (2E, E) weight is split
    into wf_in (acts on in_emb) and wf_out (acts on out_emb).
    """
    B, S, E = item_seq_emb.shape
    out_dtype = item_seq_emb.dtype
    w_in, b_in, w_out, b_out, wf_in, wf_out, b_f = params

    # ---- wrapper-side algebraic fusion (tiny one-time matmuls) ----
    w_in_f = jnp.dot(w_in, wf_in)                                    # (E, E)
    w_out_f = jnp.dot(w_out, wf_out)                                 # (E, E)
    b_fused = jnp.dot(b_in, wf_in) + jnp.dot(b_out, wf_out) + b_f    # (1, E)

    # ---- pad batch & sequence to sublane multiples so every block dim is
    # full-or-multiple-of-8 and in-kernel concats are tile-aligned ----
    Sp = _round_up(S, 8)
    Bp = _round_up(B, 8)
    pad_b, pad_s = Bp - B, Sp - S
    x = jnp.pad(item_seq_emb, ((0, pad_b), (0, pad_s), (0, 0)))
    a_in = jnp.pad(adj_in, ((0, pad_b), (0, pad_s), (0, pad_s)))
    a_out = jnp.pad(adj_out, ((0, pad_b), (0, pad_s), (0, pad_s)))

    # adj_in | adj_out along the contraction axis -> one fused K=2*Sp matmul.
    adj_cat = jnp.concatenate([a_in, a_out], axis=2)         # (Bp, Sp, 2*Sp)

    compute_dtype = jnp.bfloat16 if use_bf16 else x.dtype
    x = x.astype(compute_dtype)
    adj_cat = adj_cat.astype(compute_dtype)
    w_in_f = w_in_f.astype(compute_dtype)
    w_out_f = w_out_f.astype(compute_dtype)
    b_fused = b_fused.astype(jnp.float32)

    if lane_dense:
        adj_arr = adj_cat.reshape(Bp, 2 * Sp * Sp)           # lane-dense slabs
        x_arr = x.reshape(Bp, Sp * E)
    else:
        adj_arr, x_arr = adj_cat, x

    itemsize = jnp.dtype(compute_dtype).itemsize
    vmem_cap = _vmem_capacity_bytes()
    budget = min(24 << 20, vmem_cap // 4)

    if block_batch is None:
        BT = _pick_block_batch(Bp, Sp, E, itemsize, budget, lane_dense)
    else:
        BT = block_batch
        assert Bp % BT == 0 and (BT % 8 == 0 or BT == Bp), \
            "block_batch must divide the padded batch and be a multiple of 8"
    grid = (Bp // BT,)

    # VMEM limit from the padded footprint, clamped below physical capacity.
    w_bytes = 2 * (2 * _round_up(E, 8) * _round_up(E, 128) * itemsize
                   + 8 * _round_up(E, 128) * 4)
    need = _step_vmem_bytes(BT, Sp, E, itemsize, lane_dense) + w_bytes + (2 << 20)
    vmem_limit = int(min(max(need, 16 << 20), int(vmem_cap * 0.85)))

    if lane_dense:
        adj_spec = pl.BlockSpec((BT, 2 * Sp * Sp), lambda b: (b, 0))
        x_spec = pl.BlockSpec((BT, Sp * E), lambda b: (b, 0))
        out_spec = pl.BlockSpec((BT, Sp * E), lambda b: (b, 0))
        out_shape = jax.ShapeDtypeStruct((Bp, Sp * E), out_dtype)
    else:
        adj_spec = pl.BlockSpec((BT, Sp, 2 * Sp), lambda b: (b, 0, 0))
        x_spec = pl.BlockSpec((BT, Sp, E), lambda b: (b, 0, 0))
        out_spec = pl.BlockSpec((BT, Sp, E), lambda b: (b, 0, 0))
        out_shape = jax.ShapeDtypeStruct((Bp, Sp, E), out_dtype)
    w_spec = pl.BlockSpec((E, E), lambda b: (0, 0))
    bias_spec = pl.BlockSpec((1, E), lambda b: (0, 0))

    # Advisory cost so XLA can schedule the surrounding ops around the call.
    cost = pl.CostEstimate(
        flops=4 * B * S * E * (E + S),
        transcendentals=0,
        bytes_accessed=(itemsize * (2 * B * S * S + B * S * E + 2 * E * E)
                        + 4 * E
                        + jnp.dtype(out_dtype).itemsize * B * S * E))

    out = pl.pallas_call(
        _make_gated_agg_kernel(Sp, E, lane_dense),
        out_shape=out_shape,
        grid_spec=pltpu.PrefetchScalarGridSpec(
            num_scalar_prefetch=0,
            grid=grid,
            in_specs=[adj_spec, x_spec, w_spec, w_spec, bias_spec],
            out_specs=out_spec,
        ),
        compiler_params=pltpu.CompilerParams(
            dimension_semantics=("parallel",),
            vmem_limit_bytes=vmem_limit),
        cost_estimate=cost,
    )(adj_arr, x_arr, w_in_f, w_out_f, b_fused)

    return out.reshape(Bp, Sp, E)[:B, :S, :]


# --------------------------------------------------------------------------- #
# Params + pure-JAX reference                                                 #
# --------------------------------------------------------------------------- #
def init_params(key, embedding_size):
    """PyTorch-style uniform(+/- 1/sqrt(fan_in)) init; weights stored (in,out)."""
    E = embedding_size
    ks = jax.random.split(key, 7)
    bound_e = 1.0 / math.sqrt(E)
    bound_2e = 1.0 / math.sqrt(2 * E)

    w_in = jax.random.uniform(ks[0], (E, E), jnp.float32, -bound_e, bound_e)
    b_in = jax.random.uniform(ks[1], (1, E), jnp.float32, -bound_e, bound_e)
    w_out = jax.random.uniform(ks[2], (E, E), jnp.float32, -bound_e, bound_e)
    b_out = jax.random.uniform(ks[3], (1, E), jnp.float32, -bound_e, bound_e)
    wf_in = jax.random.uniform(ks[4], (E, E), jnp.float32, -bound_2e, bound_2e)
    wf_out = jax.random.uniform(ks[5], (E, E), jnp.float32, -bound_2e, bound_2e)
    b_f = jax.random.uniform(ks[6], (1, E), jnp.float32, -bound_2e, bound_2e)
    return (w_in, b_in, w_out, b_out, wf_in, wf_out, b_f)


def gated_agg_ref(item_seq_emb, adj_in, adj_out, params):
    """Pure-JAX reference matching the PyTorch module (batched matmuls)."""
    w_in, b_in, w_out, b_out, wf_in, wf_out, b_f = params
    in_emb = jnp.matmul(adj_in, item_seq_emb) @ w_in + b_in
    out_emb = jnp.matmul(adj_out, item_seq_emb) @ w_out + b_out
    return in_emb @ wf_in + out_emb @ wf_out + b_f


# --------------------------------------------------------------------------- #
# Self-test                                                                   #
# --------------------------------------------------------------------------- #
if __name__ == "__main__":
    B, S, E = 2, 8, 32
    key = jax.random.PRNGKey(0)
    k_x, k_ain, k_aout, k_p = jax.random.split(key, 4)

    item_seq_emb = jax.random.normal(k_x, (B, S, E), jnp.float32)
    adj_in = jax.random.uniform(k_ain, (B, S, S), jnp.float32)
    adj_out = jax.random.uniform(k_aout, (B, S, S), jnp.float32)
    params = init_params(k_p, E)

    ref = gated_agg_ref(item_seq_emb, adj_in, adj_out, params)

    def _run(lane_dense):
        out = gated_agg(item_seq_emb, adj_in, adj_out, params,
                        lane_dense=lane_dense)
        out = jax.block_until_ready(out)
        ok = (out.shape == (B, S, E)
              and bool(jnp.allclose(out, ref, atol=1e-4, rtol=1e-4)))
        return out, ok

    try:
        out, ok = _run(lane_dense=True)      # lane-dense fast path (default)
    except Exception:
        ok = False
    if not ok:
        # Portability fallback for Mosaic builds without general lane-splitting
        # reshape support: 3-D blocks, no in-kernel relayout (same math).
        out, ok = _run(lane_dense=False)

    assert ok, "Pallas GatedAgg does not match the reference"
    print("KERNEL_OK")
</pallas_src>

<mosaic_0001>
module attributes {stable_mosaic.version = 11 : i64} {
  func.func @kernel(%arg0: i32, %arg1: memref<8x128xf32, #tpu.memory_space<vmem>>, %arg2: memref<8x256xf32, #tpu.memory_space<vmem>>, %arg3: memref<32x32xf32, #tpu.memory_space<vmem>>, %arg4: memref<32x32xf32, #tpu.memory_space<vmem>>, %arg5: memref<1x32xf32, #tpu.memory_space<vmem>>, %arg6: memref<8x256xf32, #tpu.memory_space<vmem>>) attributes {dimension_semantics = [#tpu.dimension_semantics<parallel>], iteration_bounds = array<i64: 1>, scalar_prefetch = 0 : i64, scratch_operands = 0 : i64, tpu.core_type = #tpu.core_type<tc>, window_params = [{transform_indices = @transform_0, window_bounds = array<i64: 8, 128>}, {transform_indices = @transform_1, window_bounds = array<i64: 8, 256>}, {pipeline_mode = #tpu.pipeline_mode<synchronous>, transform_indices = @transform_2, window_bounds = array<i64: 32, 32>}, {pipeline_mode = #tpu.pipeline_mode<synchronous>, transform_indices = @transform_3, window_bounds = array<i64: 32, 32>}, {pipeline_mode = #tpu.pipeline_mode<synchronous>, transform_indices = @transform_4, window_bounds = array<i64: 1, 32>}, {transform_indices = @transform_5, window_bounds = array<i64: 8, 256>}]} {
    %c0 = arith.constant 0 : index
    %c0_0 = arith.constant 0 : index
    %0 = vector.load %arg2[%c0, %c0_0] : memref<8x256xf32, #tpu.memory_space<vmem>>, vector<8x256xf32>
    %1 = vector.shape_cast %0 : vector<8x256xf32> to vector<64x32xf32>
    %c0_1 = arith.constant 0 : index
    %c0_2 = arith.constant 0 : index
    %2 = vector.load %arg1[%c0_1, %c0_2] : memref<8x128xf32, #tpu.memory_space<vmem>>, vector<8x128xf32>
    %3 = vector.shape_cast %2 : vector<8x128xf32> to vector<8x8x16xf32>
    %c0_3 = arith.constant 0 : index
    %c0_4 = arith.constant 0 : index
    %4 = vector.load %arg3[%c0_3, %c0_4] : memref<32x32xf32, #tpu.memory_space<vmem>>, vector<32x32xf32>
    %cst = arith.constant dense<0.000000e+00> : vector<64x32xf32>
    %5 = tpu.matmul %1, %4, %cst {dimension_numbers = #tpu.dot_dimension_numbers<[1], [0], [0], [1], [0, 0, 1, 1], [], []>} : vector<64x32xf32>, vector<32x32xf32>, vector<64x32xf32> -> vector<64x32xf32>
    %c0_5 = arith.constant 0 : index
    %c0_6 = arith.constant 0 : index
    %6 = vector.load %arg4[%c0_5, %c0_6] : memref<32x32xf32, #tpu.memory_space<vmem>>, vector<32x32xf32>
    %cst_7 = arith.constant dense<0.000000e+00> : vector<64x32xf32>
    %7 = tpu.matmul %1, %6, %cst_7 {dimension_numbers = #tpu.dot_dimension_numbers<[1], [0], [0], [1], [0, 0, 1, 1], [], []>} : vector<64x32xf32>, vector<32x32xf32>, vector<64x32xf32> -> vector<64x32xf32>
    %8 = vector.shape_cast %5 : vector<64x32xf32> to vector<8x8x32xf32>
    %9 = vector.shape_cast %7 : vector<64x32xf32> to vector<8x8x32xf32>
    %10 = tpu.concatenate %8, %9 in 1 : vector<8x8x32xf32>, vector<8x8x32xf32> -> vector<8x16x32xf32>
    "tpu.trace_start"() <{level = 10 : i32, message = "bij,bje->bie"}> : () -> ()
    %cst_8 = arith.constant dense<0.000000e+00> : vector<8x8x32xf32>
    %11 = tpu.matmul %3, %10, %cst_8 {dimension_numbers = #tpu.dot_dimension_numbers<[2], [1], [1], [2], [0, 0, 0, 1, 1, 2], [0], [0]>} : vector<8x8x16xf32>, vector<8x16x32xf32>, vector<8x8x32xf32> -> vector<8x8x32xf32>
    "tpu.trace_stop"() : () -> ()
    %c0_9 = arith.constant 0 : index
    %c0_10 = arith.constant 0 : index
    %12 = vector.load %arg5[%c0_9, %c0_10] : memref<1x32xf32, #tpu.memory_space<vmem>>, vector<1x32xf32>
    %13 = vector.shape_cast %12 : vector<1x32xf32> to vector<1x1x32xf32>
    %14 = vector.broadcast %13 : vector<1x1x32xf32> to vector<8x8x32xf32>
    %15 = arith.addf %11, %14 : vector<8x8x32xf32>
    %16 = vector.shape_cast %15 : vector<8x8x32xf32> to vector<8x256xf32>
    %c0_11 = arith.constant 0 : index
    %c0_12 = arith.constant 0 : index
    %17 = vector.load %arg6[%c0_11, %c0_12] : memref<8x256xf32, #tpu.memory_space<vmem>>, vector<8x256xf32>
    tpu.vector_store %arg6[%c0_11, %c0_12], %16 {strides = array<i32>} : memref<8x256xf32, #tpu.memory_space<vmem>>, vector<8x256xf32>,
    return
  }
  func.func @transform_0(%arg0: i32) -> (i32, i32) {
    %c0_i32 = arith.constant 0 : i32
    %c0_i32_0 = arith.constant 0 : i32
    return %arg0, %c0_i32 : i32, i32
  }
  func.func @transform_1(%arg0: i32) -> (i32, i32) {
    %c0_i32 = arith.constant 0 : i32
    %c0_i32_0 = arith.constant 0 : i32
    return %arg0, %c0_i32 : i32, i32
  }
  func.func @transform_2(%arg0: i32) -> (i32, i32) {
    %c0_i32 = arith.constant 0 : i32
    %c0_i32_0 = arith.constant 0 : i32
    %c0_i32_1 = arith.constant 0 : i32
    return %c0_i32, %c0_i32_0 : i32, i32
  }
  func.func @transform_3(%arg0: i32) -> (i32, i32) {
    %c0_i32 = arith.constant 0 : i32
    %c0_i32_0 = arith.constant 0 : i32
    %c0_i32_1 = arith.constant 0 : i32
    return %c0_i32, %c0_i32_0 : i32, i32
  }
  func.func @transform_4(%arg0: i32) -> (i32, i32) {
    %c0_i32 = arith.constant 0 : i32
    %c0_i32_0 = arith.constant 0 : i32
    %c0_i32_1 = arith.constant 0 : i32
    return %c0_i32, %c0_i32_0 : i32, i32
  }
  func.func @transform_5(%arg0: i32) -> (i32, i32) {
    %c0_i32 = arith.constant 0 : i32
    %c0_i32_0 = arith.constant 0 : i32
    return %arg0, %c0_i32 : i32, i32
  }
}

module attributes {stable_mosaic.version = 11 : i64} {
  func.func @kernel(%arg0: i32, %arg1: memref<8x8x16xf32, #tpu.memory_space<vmem>>, %arg2: memref<8x8x32xf32, #tpu.memory_space<vmem>>, %arg3: memref<32x32xf32, #tpu.memory_space<vmem>>, %arg4: memref<32x32xf32, #tpu.memory_space<vmem>>, %arg5: memref<1x32xf32, #tpu.memory_space<vmem>>, %arg6: memref<8x8x32xf32, #tpu.memory_space<vmem>>) attributes {dimension_semantics = [#tpu.dimension_semantics<parallel>], iteration_bounds = array<i64: 1>, scalar_prefetch = 0 : i64, scratch_operands = 0 : i64, tpu.core_type = #tpu.core_type<tc>, window_params = [{transform_indices = @transform_0, window_bounds = array<i64: 8, 8, 16>}, {transform_indices = @transform_1, window_bounds = array<i64: 8, 8, 32>}, {pipeline_mode = #tpu.pipeline_mode<synchronous>, transform_indices = @transform_2, window_bounds = array<i64: 32, 32>}, {pipeline_mode = #tpu.pipeline_mode<synchronous>, transform_indices = @transform_3, window_bounds = array<i64: 32, 32>}, {pipeline_mode = #tpu.pipeline_mode<synchronous>, transform_indices = @transform_4, window_bounds = array<i64: 1, 32>}, {transform_indices = @transform_5, window_bounds = array<i64: 8, 8, 32>}]} {
    %c0 = arith.constant 0 : index
    %c0_0 = arith.constant 0 : index
    %c0_1 = arith.constant 0 : index
    %0 = vector.load %arg2[%c0, %c0_0, %c0_1] : memref<8x8x32xf32, #tpu.memory_space<vmem>>, vector<8x8x32xf32>
    %1 = vector.shape_cast %0 : vector<8x8x32xf32> to vector<64x32xf32>
    %c0_2 = arith.constant 0 : index
    %c0_3 = arith.constant 0 : index
    %c0_4 = arith.constant 0 : index
    %2 = vector.load %arg1[%c0_2, %c0_3, %c0_4] : memref<8x8x16xf32, #tpu.memory_space<vmem>>, vector<8x8x16xf32>
    %c0_5 = arith.constant 0 : index
    %c0_6 = arith.constant 0 : index
    %3 = vector.load %arg3[%c0_5, %c0_6] : memref<32x32xf32, #tpu.memory_space<vmem>>, vector<32x32xf32>
    %cst = arith.constant dense<0.000000e+00> : vector<64x32xf32>
    %4 = tpu.matmul %1, %3, %cst {dimension_numbers = #tpu.dot_dimension_numbers<[1], [0], [0], [1], [0, 0, 1, 1], [], []>} : vector<64x32xf32>, vector<32x32xf32>, vector<64x32xf32> -> vector<64x32xf32>
    %c0_7 = arith.constant 0 : index
    %c0_8 = arith.constant 0 : index
    %5 = vector.load %arg4[%c0_7, %c0_8] : memref<32x32xf32, #tpu.memory_space<vmem>>, vector<32x32xf32>
    %cst_9 = arith.constant dense<0.000000e+00> : vector<64x32xf32>
    %6 = tpu.matmul %1, %5, %cst_9 {dimension_numbers = #tpu.dot_dimension_numbers<[1], [0], [0], [1], [0, 0, 1, 1], [], []>} : vector<64x32xf32>, vector<32x32xf32>, vector<64x32xf32> -> vector<64x32xf32>
    %7 = vector.shape_cast %4 : vector<64x32xf32> to vector<8x8x32xf32>
    %8 = vector.shape_cast %6 : vector<64x32xf32> to vector<8x8x32xf32>
    %9 = tpu.concatenate %7, %8 in 1 : vector<8x8x32xf32>, vector<8x8x32xf32> -> vector<8x16x32xf32>
    "tpu.trace_start"() <{level = 10 : i32, message = "bij,bje->bie"}> : () -> ()
    %cst_10 = arith.constant dense<0.000000e+00> : vector<8x8x32xf32>
    %10 = tpu.matmul %2, %9, %cst_10 {dimension_numbers = #tpu.dot_dimension_numbers<[2], [1], [1], [2], [0, 0, 0, 1, 1, 2], [0], [0]>} : vector<8x8x16xf32>, vector<8x16x32xf32>, vector<8x8x32xf32> -> vector<8x8x32xf32>
    "tpu.trace_stop"() : () -> ()
    %c0_11 = arith.constant 0 : index
    %c0_12 = arith.constant 0 : index
    %11 = vector.load %arg5[%c0_11, %c0_12] : memref<1x32xf32, #tpu.memory_space<vmem>>, vector<1x32xf32>
    %12 = vector.shape_cast %11 : vector<1x32xf32> to vector<1x1x32xf32>
    %13 = vector.broadcast %12 : vector<1x1x32xf32> to vector<8x8x32xf32>
    %14 = arith.addf %10, %13 : vector<8x8x32xf32>
    %c0_13 = arith.constant 0 : index
    %c0_14 = arith.constant 0 : index
    %c0_15 = arith.constant 0 : index
    %15 = vector.load %arg6[%c0_13, %c0_14, %c0_15] : memref<8x8x32xf32, #tpu.memory_space<vmem>>, vector<8x8x32xf32>
    tpu.vector_store %arg6[%c0_13, %c0_14, %c0_15], %14 {strides = array<i32>} : memref<8x8x32xf32, #tpu.memory_space<vmem>>, vector<8x8x32xf32>,
    return
  }
  func.func @transform_0(%arg0: i32) -> (i32, i32, i32) {
    %c0_i32 = arith.constant 0 : i32
    %c0_i32_0 = arith.constant 0 : i32
    %c0_i32_1 = arith.constant 0 : i32
    return %arg0, %c0_i32, %c0_i32_0 : i32, i32, i32
  }
  func.func @transform_1(%arg0: i32) -> (i32, i32, i32) {
    %c0_i32 = arith.constant 0 : i32
    %c0_i32_0 = arith.constant 0 : i32
    %c0_i32_1 = arith.constant 0 : i32
    return %arg0, %c0_i32, %c0_i32_0 : i32, i32, i32
  }
  func.func @transform_2(%arg0: i32) -> (i32, i32) {
    %c0_i32 = arith.constant 0 : i32
    %c0_i32_0 = arith.constant 0 : i32
    %c0_i32_1 = arith.constant 0 : i32
    return %c0_i32, %c0_i32_0 : i32, i32
  }
  func.func @transform_3(%arg0: i32) -> (i32, i32) {
    %c0_i32 = arith.constant 0 : i32
    %c0_i32_0 = arith.constant 0 : i32
    %c0_i32_1 = arith.constant 0 : i32
    return %c0_i32, %c0_i32_0 : i32, i32
  }
  func.func @transform_4(%arg0: i32) -> (i32, i32) {
    %c0_i32 = arith.constant 0 : i32
    %c0_i32_0 = arith.constant 0 : i32
    %c0_i32_1 = arith.constant 0 : i32
    return %c0_i32, %c0_i32_0 : i32, i32
  }
  func.func @transform_5(%arg0: i32) -> (i32, i32, i32) {
    %c0_i32 = arith.constant 0 : i32
    %c0_i32_0 = arith.constant 0 : i32
    %c0_i32_1 = arith.constant 0 : i32
    return %arg0, %c0_i32, %c0_i32_0 : i32, i32, i32
  }
}

</mosaic_0001>

<llo_original>
// kernel: tpu_custom_call.1
$region0: #{tpu_custom_call.1}
  #allocation0 [shape = 'u32[]', space=smem, size = 0x4, offset = 0x4, fixed_abs, tag = 'smem constant byte address 0x4 - core index']
  #allocation1 [shape = 'u32[144,128]{1,0:T(1,128)}', space=vmem, size = 0x12000, scoped, tag = 'internal scratch']
  %s0 = inlined_call_operand.hbm [shape: f32[8,8,16], index: 0, kind: input, shape index: {}]
  %s1 = inlined_call_operand.hbm [shape: f32[8,8,32], index: 1, kind: input, shape index: {}]
  %s2 = inlined_call_operand.hbm [shape: f32[32,32], index: 2, kind: input, shape index: {}]
  %s3 = inlined_call_operand.hbm [shape: f32[32,32], index: 3, kind: input, shape index: {}]
  %s4 = inlined_call_operand.vmem [shape: f32[1,32], index: 4, kind: input, shape index: {}]
  %s5 = inlined_call_operand.hbm [shape: f32[8,8,32], index: 5, kind: output, shape index: {}]
  %s6 = sld [smem:[#allocation0]]
  $region46: #{tpu_custom_call.1} parent=0
    _
  %s8 = ssub.s32 1, %s6
  %s9 = scalar_select 0, %s8, %s6
  $region1: #{tpu_custom_call.1} parent=0
    #allocation2 [shape = 'u8[32768]{0}', space=vmem, size = 0x8000, scoped, tag = 'input window, operand 0, single buffered']
    #allocation3 [shape = 's32[1]{0}', space=sflag, size = 0x4, scoped, tag = 'scoped memory for tpu_custom_call.1']
    #allocation4 [shape = 's32[1]{0}', space=sflag, size = 0x4, scoped, tag = 'scoped memory for tpu_custom_call.1']
    #allocation5 [shape = 'u8[32768]{0}', space=vmem, size = 0x8000, scoped, tag = 'input window, operand 1, single buffered']
    #allocation6 [shape = 's32[1]{0}', space=sflag, size = 0x4, scoped, tag = 'scoped memory for tpu_custom_call.1']
    #allocation7 [shape = 'u8[16384]{0}', space=vmem, size = 0x4000, scoped, tag = 'input window, operand 2, single buffered']
    #allocation8 [shape = 'u8[16384]{0}', space=vmem, size = 0x4000, scoped, tag = 'input window, operand 3, single buffered']
    #allocation9 [shape = 's32[1]{0}', space=sflag, size = 0x4, scoped, tag = 'scoped memory for tpu_custom_call.1']
    #allocation10 [shape = 'u8[32768]{0}', space=vmem, size = 0x8000, scoped, tag = 'output window, operand 0, single buffered']
    %10 = vsyncpa [#allocation3], 0
    %11 = vsyncpa [#allocation6], 0
    %12 = vsyncpa [#allocation9], 0
    %13 = vsyncpa [#allocation4], 0
    // Predicated region
    $region2: #{tpu_custom_call.1} parent=1 // pred_check
      _
    $region3: #{tpu_custom_call.1} parent=1 // pred_check_branch
      %15 = sbr.rel (0) target = $region5
    $region4: #{tpu_custom_call.1} parent=1 // pred_region
      %s17 = ssub.s32 1024, 1024
      %18 = vsyncadd [#allocation3], %s17
      %s19 = sshll.u32 [#allocation2], 4
      %s20 = int_to_ptr.vmem [resolvable:$true] %s19
      %25 = dma.hbm_to_vmem [thread:$0]  %s0, 1024, %s20, [#allocation3], 128, 128, 8
    $region5: #{tpu_custom_call.1} parent=1 // pred_fallthru
      _
    // Predicated region
    $region6: #{tpu_custom_call.1} parent=1 // pred_check
      _
    $region7: #{tpu_custom_call.1} parent=1 // pred_check_branch
      %27 = sbr.rel (0) target = $region9
    $region8: #{tpu_custom_call.1} parent=1 // pred_region
      %s29 = ssub.s32 1024, 1024
      %30 = vsyncadd [#allocation6], %s29
      %s31 = sshll.u32 [#allocation5], 4
      %s32 = int_to_ptr.vmem [resolvable:$true] %s31
      %37 = dma.hbm_to_vmem [thread:$0]  %s1, 1024, %s32, [#allocation6], 128, 128, 8
    $region9: #{tpu_custom_call.1} parent=1 // pred_fallthru
      _
    // Predicated region
    $region10: #{tpu_custom_call.1} parent=1 // pred_check
      _
    $region11: #{tpu_custom_call.1} parent=1 // pred_check_branch
      %39 = sbr.rel (0) target = $region13
    $region12: #{tpu_custom_call.1} parent=1 // pred_region
      %s41 = ssub.s32 512, 512
      %42 = vsyncadd [#allocation6], %s41
      %s43 = sshll.u32 [#allocation7], 4
      %s44 = int_to_ptr.vmem [resolvable:$true] %s43
      %49 = dma.hbm_to_vmem [thread:$0]  %s2, 512, %s44, [#allocation6], 128, 128, 8
    $region13: #{tpu_custom_call.1} parent=1 // pred_fallthru
      _
    // Predicated region
    $region14: #{tpu_custom_call.1} parent=1 // pred_check
      _
    $region15: #{tpu_custom_call.1} parent=1 // pred_check_branch
      %51 = sbr.rel (0) target = $region17
    $region16: #{tpu_custom_call.1} parent=1 // pred_region
      %s53 = ssub.s32 512, 512
      %54 = vsyncadd [#allocation9], %s53
      %s55 = sshll.u32 [#allocation8], 4
      %s56 = int_to_ptr.vmem [resolvable:$true] %s55
      %61 = dma.hbm_to_vmem [thread:$0]  %s3, 512, %s56, [#allocation9], 128, 128, 8
    $region17: #{tpu_custom_call.1} parent=1 // pred_fallthru
      _
    // Predicated region
    $region18: #{tpu_custom_call.1} parent=1 // pred_check
      _
    $region19: #{tpu_custom_call.1} parent=1 // pred_check_branch
      %63 = sbr.rel (0) target = $region21
    $region20: #{tpu_custom_call.1} parent=1 // pred_region
      _
    $region21: #{tpu_custom_call.1} parent=1 // pred_fallthru
      _
    // Predicated region
    $region22: #{tpu_custom_call.1} parent=1 // pred_check
      _
    $region23: #{tpu_custom_call.1} parent=1 // pred_check_branch
      %65 = sbr.rel (0) target = $region25
    $region24: #{tpu_custom_call.1} parent=1 // pred_region
      %66 = dma.done [#allocation3], 1024
    $region25: #{tpu_custom_call.1} parent=1 // pred_fallthru
      _
    // Predicated region
    $region26: #{tpu_custom_call.1} parent=1 // pred_check
      _
    $region27: #{tpu_custom_call.1} parent=1 // pred_check_branch
      %68 = sbr.rel (0) target = $region29
    $region28: #{tpu_custom_call.1} parent=1 // pred_region
      %69 = dma.done [#allocation6], 1024
    $region29: #{tpu_custom_call.1} parent=1 // pred_fallthru
      _
    // Predicated region
    $region30: #{tpu_custom_call.1} parent=1 // pred_check
      _
    $region31: #{tpu_custom_call.1} parent=1 // pred_check_branch
      %71 = sbr.rel (0) target = $region33
    $region32: #{tpu_custom_call.1} parent=1 // pred_region
      %72 = dma.done [#allocation6], 512
    $region33: #{tpu_custom_call.1} parent=1 // pred_fallthru
      _
    // Predicated region
    $region34: #{tpu_custom_call.1} parent=1 // pred_check
      _
    $region35: #{tpu_custom_call.1} parent=1 // pred_check_branch
      %74 = sbr.rel (0) target = $region37
    $region36: #{tpu_custom_call.1} parent=1 // pred_region
      %75 = dma.done [#allocation9], 512
    $region37: #{tpu_custom_call.1} parent=1 // pred_fallthru
      _
    %v76 = vld [vmem:[#allocation5] sm:$0xff]
    %v77 = vld [vmem:[#allocation5 + $0x8] sm:$0xff]
    %v78 = vld [vmem:[#allocation5 + $0x10] sm:$0xff]
    %v79 = vld [vmem:[#allocation5 + $0x18] sm:$0xff]
    %v80 = vld [vmem:[#allocation5 + $0x20] sm:$0xff]
    %v81 = vld [vmem:[#allocation5 + $0x28] sm:$0xff]
    %v82 = vld [vmem:[#allocation5 + $0x30] sm:$0xff]
    %v83 = vld [vmem:[#allocation5 + $0x38] sm:$0xff]
    %v84 = vld [vmem:[#allocation2] sm:$0xff]
    %v85 = vld [vmem:[#allocation2 + $0x8] sm:$0xff]
    %v86 = vld [vmem:[#allocation2 + $0x10] sm:$0xff]
    %v87 = vld [vmem:[#allocation2 + $0x18] sm:$0xff]
    %v88 = vld [vmem:[#allocation2 + $0x20] sm:$0xff]
    %v89 = vld [vmem:[#allocation2 + $0x28] sm:$0xff]
    %v90 = vld [vmem:[#allocation2 + $0x30] sm:$0xff]
    %v91 = vld [vmem:[#allocation2 + $0x38] sm:$0xff]
    %v92 = vld [vmem:[#allocation7] sm:$0xff]
    %v93 = vld [vmem:[#allocation7 + $0x8] sm:$0xff]
    %v94 = vld [vmem:[#allocation7 + $0x10] sm:$0xff]
    %v95 = vld [vmem:[#allocation7 + $0x18] sm:$0xff]
    %vm96 = vcmask 261120
    %v98 = vsel %vm96, %v76, 0
    %v101 = vsel %vm96, %v77, 0
    %v104 = vsel %vm96, %v78, 0
    %v107 = vsel %vm96, %v79, 0
    %v110 = vsel %vm96, %v80, 0
    %v113 = vsel %vm96, %v81, 0
    %v116 = vsel %vm96, %v82, 0
    %v119 = vsel %vm96, %v83, 0
    %121 = vmatprep.subr.mxu0 0.0
    %122 = vmatpush1.msra.mxu0 %v92
    %123 = vmatprep.subr.mxu0 0.0
    %124 = vmatpush1.msra.mxu0 %v93
    %125 = vmatprep.subr.mxu0 0.0
    %126 = vmatpush1.msra.mxu0 %v94
    %127 = vmatprep.subr.mxu0 0.0
    %128 = vmatpush1.msra.mxu0 %v95
    %129 = vmatprep.subr.mxu0 0.0
    %130 = vmatpush1.msra.mxu0 0.0
    %131 = vmatprep.subr.mxu0 0.0
    %132 = vmatpush1.msra.mxu0 0.0
    %133 = vmatprep.subr.mxu0 0.0
    %134 = vmatpush1.msra.mxu0 0.0
    %135 = vmatprep.subr.mxu0 0.0
    %136 = vmatpush1.msra.mxu0 0.0
    %137 = vmatprep.subr.mxu0 0.0
    %138 = vmatpush1.msra.mxu0 0.0
    %139 = vmatprep.subr.mxu0 0.0
    %140 = vmatpush1.msra.mxu0 0.0
    %141 = vmatprep.subr.mxu0 0.0
    %142 = vmatpush1.msra.mxu0 0.0
    %143 = vmatprep.subr.mxu0 0.0
    %144 = vmatpush1.msra.mxu0 0.0
    %145 = vmatprep.subr.mxu0 0.0
    %146 = vmatpush1.msra.mxu0 0.0
    %147 = vmatprep.subr.mxu0 0.0
    %148 = vmatpush1.msra.mxu0 0.0
    %149 = vmatprep.subr.mxu0 0.0
    %150 = vmatpush1.msra.mxu0 0.0
    %151 = vmatprep.subr.mxu0 0.0
    %152 = vmatpush1.msra.mxu0 0.0
    %153 = vmatprep.subr.mxu0 0.0
    %154 = vmatpush1.msra.mxu0 0.0
    %155 = vmatprep.subr.mxu0 0.0
    %156 = vmatpush1.msra.mxu0 0.0
    %157 = vmatprep.subr.mxu0 0.0
    %158 = vmatpush1.msra.mxu0 0.0
    %159 = vmatprep.subr.mxu0 0.0
    %160 = vmatpush1.msra.mxu0 0.0
    %161 = vmatprep.subr.mxu0 0.0
    %162 = vmatpush1.msra.mxu0 0.0
    %163 = vmatprep.subr.mxu0 0.0
    %164 = vmatpush1.msra.mxu0 0.0
    %165 = vmatprep.subr.mxu0 0.0
    %166 = vmatpush1.msra.mxu0 0.0
    %167 = vmatprep.subr.mxu0 0.0
    %168 = vmatpush1.msra.mxu0 0.0
    %169 = vmatprep.subr.mxu0 0.0
    %170 = vmatpush1.msra.mxu0 0.0
    %171 = vmatprep.subr.mxu0 0.0
    %172 = vmatpush1.msra.mxu0 0.0
    %173 = vmatprep.subr.mxu0 0.0
    %174 = vmatpush1.msra.mxu0 0.0
    %175 = vmatprep.subr.mxu0 0.0
    %176 = vmatpush1.msra.mxu0 0.0
    %177 = vmatprep.subr.mxu0 0.0
    %178 = vmatpush1.msra.mxu0 0.0
    %179 = vmatprep.subr.mxu0 0.0
    %180 = vmatpush1.msra.mxu0 0.0
    %181 = vmatprep.subr.mxu0 0.0
    %182 = vmatpush1.msra.mxu0 0.0
    %183 = vmatprep.subr.mxu0 0.0
    %184 = vmatpush1.msra.mxu0 0.0
    %185 = vmatprep.mubr.f32.mxu0 0.0
    %186 = vmatmul.mubr.f32.gmra.mrb[0].mxu0 %v98
    %v187 = vpop.f32.mrb[0].mxu0
    %v188 = vadd.f32 0.0, %v187
    %v189 = vpop.f32.mrb[0].mxu0
    %190 = vmatprep.mubr.f32.mxu0 0.0
    %191 = vmatmul.mubr.f32.gmra.mrb[0].mxu0 %v101
    %v192 = vpop.f32.mrb[0].mxu0
    %v193 = vadd.f32 0.0, %v192
    %v194 = vpop.f32.mrb[0].mxu0
    %195 = vmatprep.mubr.f32.mxu0 0.0
    %196 = vmatmul.mubr.f32.gmra.mrb[0].mxu0 %v104
    %v197 = vpop.f32.mrb[0].mxu0
    %v198 = vadd.f32 0.0, %v197
    %v199 = vpop.f32.mrb[0].mxu0
    %200 = vmatprep.mubr.f32.mxu0 0.0
    %201 = vmatmul.mubr.f32.gmra.mrb[0].mxu0 %v107
    %v202 = vpop.f32.mrb[0].mxu0
    %v203 = vadd.f32 0.0, %v202
    %v204 = vpop.f32.mrb[0].mxu0
    %205 = vmatprep.mubr.f32.mxu0 0.0
    %206 = vmatmul.mubr.f32.gmra.mrb[0].mxu0 %v110
    %v207 = vpop.f32.mrb[0].mxu0
    %v208 = vadd.f32 0.0, %v207
    %v209 = vpop.f32.mrb[0].mxu0
    %210 = vmatprep.mubr.f32.mxu0 0.0
    %211 = vmatmul.mubr.f32.gmra.mrb[0].mxu0 %v113
    %v212 = vpop.f32.mrb[0].mxu0
    %v213 = vadd.f32 0.0, %v212
    %v214 = vpop.f32.mrb[0].mxu0
    %215 = vmatprep.mubr.f32.mxu0 0.0
    %216 = vmatmul.mubr.f32.gmra.mrb[0].mxu0 %v116
    %v217 = vpop.f32.mrb[0].mxu0
    %v218 = vadd.f32 0.0, %v217
    %v219 = vpop.f32.mrb[0].mxu0
    %220 = vmatprep.mubr.f32.mxu0 0.0
    %221 = vmatmul.mubr.f32.gmra.mrb[0].mxu0 %v119
    %v222 = vpop.f32.mrb[0].mxu0
    %v223 = vadd.f32 0.0, %v222
    %v224 = vpop.f32.mrb[0].mxu0
    %225 = vdwg.mxu0
    %v226 = vld [vmem:[#allocation8] sm:$0xff]
    %v227 = vld [vmem:[#allocation8 + $0x8] sm:$0xff]
    %v228 = vld [vmem:[#allocation8 + $0x10] sm:$0xff]
    %v229 = vld [vmem:[#allocation8 + $0x18] sm:$0xff]
    %230 = vmatprep.subr.mxu0 0.0
    %231 = vmatpush1.msra.mxu0 %v226
    %232 = vmatprep.subr.mxu0 0.0
    %233 = vmatpush1.msra.mxu0 %v227
    %234 = vmatprep.subr.mxu0 0.0
    %235 = vmatpush1.msra.mxu0 %v228
    %236 = vmatprep.subr.mxu0 0.0
    %237 = vmatpush1.msra.mxu0 %v229
    %238 = vmatprep.subr.mxu0 0.0
    %239 = vmatpush1.msra.mxu0 0.0
    %240 = vmatprep.subr.mxu0 0.0
    %241 = vmatpush1.msra.mxu0 0.0
    %242 = vmatprep.subr.mxu0 0.0
    %243 = vmatpush1.msra.mxu0 0.0
    %244 = vmatprep.subr.mxu0 0.0
    %245 = vmatpush1.msra.mxu0 0.0
    %246 = vmatprep.subr.mxu0 0.0
    %247 = vmatpush1.msra.mxu0 0.0
    %248 = vmatprep.subr.mxu0 0.0
    %249 = vmatpush1.msra.mxu0 0.0
    %250 = vmatprep.subr.mxu0 0.0
    %251 = vmatpush1.msra.mxu0 0.0
    %252 = vmatprep.subr.mxu0 0.0
    %253 = vmatpush1.msra.mxu0 0.0
    %254 = vmatprep.subr.mxu0 0.0
    %255 = vmatpush1.msra.mxu0 0.0
    %256 = vmatprep.subr.mxu0 0.0
    %257 = vmatpush1.msra.mxu0 0.0
    %258 = vmatprep.subr.mxu0 0.0
    %259 = vmatpush1.msra.mxu0 0.0
    %260 = vmatprep.subr.mxu0 0.0
    %261 = vmatpush1.msra.mxu0 0.0
    %262 = vmatprep.subr.mxu0 0.0
    %263 = vmatpush1.msra.mxu0 0.0
    %264 = vmatprep.subr.mxu0 0.0
    %265 = vmatpush1.msra.mxu0 0.0
    %266 = vmatprep.subr.mxu0 0.0
    %267 = vmatpush1.msra.mxu0 0.0
    %268 = vmatprep.subr.mxu0 0.0
    %269 = vmatpush1.msra.mxu0 0.0
    %270 = vmatprep.subr.mxu0 0.0
    %271 = vmatpush1.msra.mxu0 0.0
    %272 = vmatprep.subr.mxu0 0.0
    %273 = vmatpush1.msra.mxu0 0.0
    %274 = vmatprep.subr.mxu0 0.0
    %275 = vmatpush1.msra.mxu0 0.0
    %276 = vmatprep.subr.mxu0 0.0
    %277 = vmatpush1.msra.mxu0 0.0
    %278 = vmatprep.subr.mxu0 0.0
    %279 = vmatpush1.msra.mxu0 0.0
    %280 = vmatprep.subr.mxu0 0.0
    %281 = vmatpush1.msra.mxu0 0.0
    %282 = vmatprep.subr.mxu0 0.0
    %283 = vmatpush1.msra.mxu0 0.0
    %284 = vmatprep.subr.mxu0 0.0
    %285 = vmatpush1.msra.mxu0 0.0
    %286 = vmatprep.subr.mxu0 0.0
    %287 = vmatpush1.msra.mxu0 0.0
    %288 = vmatprep.subr.mxu0 0.0
    %289 = vmatpush1.msra.mxu0 0.0
    %290 = vmatprep.subr.mxu0 0.0
    %291 = vmatpush1.msra.mxu0 0.0
    %292 = vmatprep.subr.mxu0 0.0
    %293 = vmatpush1.msra.mxu0 0.0
    %294 = vmatprep.mubr.f32.mxu0 0.0
    %295 = vmatmul.mubr.f32.gmra.mrb[0].mxu0 %v98
    %v296 = vpop.f32.mrb[0].mxu0
    %v297 = vadd.f32 0.0, %v296
    %v298 = vpop.f32.mrb[0].mxu0
    %299 = vmatprep.mubr.f32.mxu0 0.0
    %300 = vmatmul.mubr.f32.gmra.mrb[0].mxu0 %v101
    %v301 = vpop.f32.mrb[0].mxu0
    %v302 = vadd.f32 0.0, %v301
    %v303 = vpop.f32.mrb[0].mxu0
    %304 = vmatprep.mubr.f32.mxu0 0.0
    %305 = vmatmul.mubr.f32.gmra.mrb[0].mxu0 %v104
    %v306 = vpop.f32.mrb[0].mxu0
    %v307 = vadd.f32 0.0, %v306
    %v308 = vpop.f32.mrb[0].mxu0
    %309 = vmatprep.mubr.f32.mxu0 0.0
    %310 = vmatmul.mubr.f32.gmra.mrb[0].mxu0 %v107
    %v311 = vpop.f32.mrb[0].mxu0
    %v312 = vadd.f32 0.0, %v311
    %v313 = vpop.f32.mrb[0].mxu0
    %314 = vmatprep.mubr.f32.mxu0 0.0
    %315 = vmatmul.mubr.f32.gmra.mrb[0].mxu0 %v110
    %v316 = vpop.f32.mrb[0].mxu0
    %v317 = vadd.f32 0.0, %v316
    %v318 = vpop.f32.mrb[0].mxu0
    %319 = vmatprep.mubr.f32.mxu0 0.0
    %320 = vmatmul.mubr.f32.gmra.mrb[0].mxu0 %v113
    %v321 = vpop.f32.mrb[0].mxu0
    %v322 = vadd.f32 0.0, %v321
    %v323 = vpop.f32.mrb[0].mxu0
    %324 = vmatprep.mubr.f32.mxu0 0.0
    %325 = vmatmul.mubr.f32.gmra.mrb[0].mxu0 %v116
    %v326 = vpop.f32.mrb[0].mxu0
    %v327 = vadd.f32 0.0, %v326
    %v328 = vpop.f32.mrb[0].mxu0
    %329 = vmatprep.mubr.f32.mxu0 0.0
    %330 = vmatmul.mubr.f32.gmra.mrb[0].mxu0 %v119
    %v331 = vpop.f32.mrb[0].mxu0
    %v332 = vadd.f32 0.0, %v331
    %v333 = vpop.f32.mrb[0].mxu0
    %334 = vdwg.mxu0
    %v335 = vld [vmem:[%s4] sm:$0x1]
    %v337 = vlaneseq
    %v338 = vshrl.u32 %v337, 7
    %v339 = vsub.s32 0, %v338
    %v340 = vrot.slane %v335, %v339
    %vm342 = vcmask 130048
    %v344 = vsel %vm342, %v84, 0
    %346 = vmatprep.subr.mxu0 0.0
    %347 = vmatpush1.msra.mxu0 %v188
    %348 = vmatprep.subr.mxu0 0.0
    %349 = vmatpush1.msra.mxu0 %v297
    %350 = vmatprep.subr.mxu0 0.0
    %351 = vmatpush1.msra.mxu0 0.0
    %352 = vmatprep.subr.mxu0 0.0
    %353 = vmatpush1.msra.mxu0 0.0
    %354 = vmatprep.subr.mxu0 0.0
    %355 = vmatpush1.msra.mxu0 0.0
    %356 = vmatprep.subr.mxu0 0.0
    %357 = vmatpush1.msra.mxu0 0.0
    %358 = vmatprep.subr.mxu0 0.0
    %359 = vmatpush1.msra.mxu0 0.0
    %360 = vmatprep.subr.mxu0 0.0
    %361 = vmatpush1.msra.mxu0 0.0
    %362 = vmatprep.subr.mxu0 0.0
    %363 = vmatpush1.msra.mxu0 0.0
    %364 = vmatprep.subr.mxu0 0.0
    %365 = vmatpush1.msra.mxu0 0.0
    %366 = vmatprep.subr.mxu0 0.0
    %367 = vmatpush1.msra.mxu0 0.0
    %368 = vmatprep.subr.mxu0 0.0
    %369 = vmatpush1.msra.mxu0 0.0
    %370 = vmatprep.subr.mxu0 0.0
    %371 = vmatpush1.msra.mxu0 0.0
    %372 = vmatprep.subr.mxu0 0.0
    %373 = vmatpush1.msra.mxu0 0.0
    %374 = vmatprep.subr.mxu0 0.0
    %375 = vmatpush1.msra.mxu0 0.0
    %376 = vmatprep.subr.mxu0 0.0
    %377 = vmatpush1.msra.mxu0 0.0
    %378 = vmatprep.subr.mxu0 0.0
    %379 = vmatpush1.msra.mxu0 0.0
    %380 = vmatprep.subr.mxu0 0.0
    %381 = vmatpush1.msra.mxu0 0.0
    %382 = vmatprep.subr.mxu0 0.0
    %383 = vmatpush1.msra.mxu0 0.0
    %384 = vmatprep.subr.mxu0 0.0
    %385 = vmatpush1.msra.mxu0 0.0
    %386 = vmatprep.subr.mxu0 0.0
    %387 = vmatpush1.msra.mxu0 0.0
    %388 = vmatprep.subr.mxu0 0.0
    %389 = vmatpush1.msra.mxu0 0.0
    %390 = vmatprep.subr.mxu0 0.0
    %391 = vmatpush1.msra.mxu0 0.0
    %392 = vmatprep.subr.mxu0 0.0
    %393 = vmatpush1.msra.mxu0 0.0
    %394 = vmatprep.subr.mxu0 0.0
    %395 = vmatpush1.msra.mxu0 0.0
    %396 = vmatprep.subr.mxu0 0.0
    %397 = vmatpush1.msra.mxu0 0.0
    %398 = vmatprep.subr.mxu0 0.0
    %399 = vmatpush1.msra.mxu0 0.0
    %400 = vmatprep.subr.mxu0 0.0
    %401 = vmatpush1.msra.mxu0 0.0
    %402 = vmatprep.subr.mxu0 0.0
    %403 = vmatpush1.msra.mxu0 0.0
    %404 = vmatprep.subr.mxu0 0.0
    %405 = vmatpush1.msra.mxu0 0.0
    %406 = vmatprep.subr.mxu0 0.0
    %407 = vmatpush1.msra.mxu0 0.0
    %408 = vmatprep.subr.mxu0 0.0
    %409 = vmatpush1.msra.mxu0 0.0
    %410 = vmatprep.mubr.f32.mxu0 0.0
    %411 = vmatmul.mubr.f32.gmra.mrb[0].mxu0 %v344
    %v412 = vpop.f32.mrb[0].mxu0
    %v413 = vadd.f32 %v340, %v412
    %v414 = vpop.f32.mrb[0].mxu0
    %415 = vdwg.mxu0
    %v417 = vsel %vm342, %v85, 0
    %419 = vmatprep.subr.mxu0 0.0
    %420 = vmatpush1.msra.mxu0 %v193
    %421 = vmatprep.subr.mxu0 0.0
    %422 = vmatpush1.msra.mxu0 %v302
    %423 = vmatprep.subr.mxu0 0.0
    %424 = vmatpush1.msra.mxu0 0.0
    %425 = vmatprep.subr.mxu0 0.0
    %426 = vmatpush1.msra.mxu0 0.0
    %427 = vmatprep.subr.mxu0 0.0
    %428 = vmatpush1.msra.mxu0 0.0
    %429 = vmatprep.subr.mxu0 0.0
    %430 = vmatpush1.msra.mxu0 0.0
    %431 = vmatprep.subr.mxu0 0.0
    %432 = vmatpush1.msra.mxu0 0.0
    %433 = vmatprep.subr.mxu0 0.0
    %434 = vmatpush1.msra.mxu0 0.0
    %435 = vmatprep.subr.mxu0 0.0
    %436 = vmatpush1.msra.mxu0 0.0
    %437 = vmatprep.subr.mxu0 0.0
    %438 = vmatpush1.msra.mxu0 0.0
    %439 = vmatprep.subr.mxu0 0.0
    %440 = vmatpush1.msra.mxu0 0.0
    %441 = vmatprep.subr.mxu0 0.0
    %442 = vmatpush1.msra.mxu0 0.0
    %443 = vmatprep.subr.mxu0 0.0
    %444 = vmatpush1.msra.mxu0 0.0
    %445 = vmatprep.subr.mxu0 0.0
    %446 = vmatpush1.msra.mxu0 0.0
    %447 = vmatprep.subr.mxu0 0.0
    %448 = vmatpush1.msra.mxu0 0.0
    %449 = vmatprep.subr.mxu0 0.0
    %450 = vmatpush1.msra.mxu0 0.0
    %451 = vmatprep.subr.mxu0 0.0
    %452 = vmatpush1.msra.mxu0 0.0
    %453 = vmatprep.subr.mxu0 0.0
    %454 = vmatpush1.msra.mxu0 0.0
    %455 = vmatprep.subr.mxu0 0.0
    %456 = vmatpush1.msra.mxu0 0.0
    %457 = vmatprep.subr.mxu0 0.0
    %458 = vmatpush1.msra.mxu0 0.0
    %459 = vmatprep.subr.mxu0 0.0
    %460 = vmatpush1.msra.mxu0 0.0
    %461 = vmatprep.subr.mxu0 0.0
    %462 = vmatpush1.msra.mxu0 0.0
    %463 = vmatprep.subr.mxu0 0.0
    %464 = vmatpush1.msra.mxu0 0.0
    %465 = vmatprep.subr.mxu0 0.0
    %466 = vmatpush1.msra.mxu0 0.0
    %467 = vmatprep.subr.mxu0 0.0
    %468 = vmatpush1.msra.mxu0 0.0
    %469 = vmatprep.subr.mxu0 0.0
    %470 = vmatpush1.msra.mxu0 0.0
    %471 = vmatprep.subr.mxu0 0.0
    %472 = vmatpush1.msra.mxu0 0.0
    %473 = vmatprep.subr.mxu0 0.0
    %474 = vmatpush1.msra.mxu0 0.0
    %475 = vmatprep.subr.mxu0 0.0
    %476 = vmatpush1.msra.mxu0 0.0
    %477 = vmatprep.subr.mxu0 0.0
    %478 = vmatpush1.msra.mxu0 0.0
    %479 = vmatprep.subr.mxu0 0.0
    %480 = vmatpush1.msra.mxu0 0.0
    %481 = vmatprep.subr.mxu0 0.0
    %482 = vmatpush1.msra.mxu0 0.0
    %483 = vmatprep.mubr.f32.mxu0 0.0
    %484 = vmatmul.mubr.f32.gmra.mrb[0].mxu0 %v417
    %v485 = vpop.f32.mrb[0].mxu0
    %v486 = vadd.f32 %v340, %v485
    %v487 = vpop.f32.mrb[0].mxu0
    %488 = vdwg.mxu0
    %v490 = vsel %vm342, %v86, 0
    %492 = vmatprep.subr.mxu0 0.0
    %493 = vmatpush1.msra.mxu0 %v198
    %494 = vmatprep.subr.mxu0 0.0
    %495 = vmatpush1.msra.mxu0 %v307
    %496 = vmatprep.subr.mxu0 0.0
    %497 = vmatpush1.msra.mxu0 0.0
    %498 = vmatprep.subr.mxu0 0.0
    %499 = vmatpush1.msra.mxu0 0.0
    %500 = vmatprep.subr.mxu0 0.0
    %501 = vmatpush1.msra.mxu0 0.0
    %502 = vmatprep.subr.mxu0 0.0
    %503 = vmatpush1.msra.mxu0 0.0
    %504 = vmatprep.subr.mxu0 0.0
    %505 = vmatpush1.msra.mxu0 0.0
    %506 = vmatprep.subr.mxu0 0.0
    %507 = vmatpush1.msra.mxu0 0.0
    %508 = vmatprep.subr.mxu0 0.0
    %509 = vmatpush1.msra.mxu0 0.0
    %510 = vmatprep.subr.mxu0 0.0
    %511 = vmatpush1.msra.mxu0 0.0
    %512 = vmatprep.subr.mxu0 0.0
    %513 = vmatpush1.msra.mxu0 0.0
    %514 = vmatprep.subr.mxu0 0.0
    %515 = vmatpush1.msra.mxu0 0.0
    %516 = vmatprep.subr.mxu0 0.0
    %517 = vmatpush1.msra.mxu0 0.0
    %518 = vmatprep.subr.mxu0 0.0
    %519 = vmatpush1.msra.mxu0 0.0
    %520 = vmatprep.subr.mxu0 0.0
    %521 = vmatpush1.msra.mxu0 0.0
    %522 = vmatprep.subr.mxu0 0.0
    %523 = vmatpush1.msra.mxu0 0.0
    %524 = vmatprep.subr.mxu0 0.0
    %525 = vmatpush1.msra.mxu0 0.0
    %526 = vmatprep.subr.mxu0 0.0
    %527 = vmatpush1.msra.mxu0 0.0
    %528 = vmatprep.subr.mxu0 0.0
    %529 = vmatpush1.msra.mxu0 0.0
    %530 = vmatprep.subr.mxu0 0.0
    %531 = vmatpush1.msra.mxu0 0.0
    %532 = vmatprep.subr.mxu0 0.0
    %533 = vmatpush1.msra.mxu0 0.0
    %534 = vmatprep.subr.mxu0 0.0
    %535 = vmatpush1.msra.mxu0 0.0
    %536 = vmatprep.subr.mxu0 0.0
    %537 = vmatpush1.msra.mxu0 0.0
    %538 = vmatprep.subr.mxu0 0.0
    %539 = vmatpush1.msra.mxu0 0.0
    %540 = vmatprep.subr.mxu0 0.0
    %541 = vmatpush1.msra.mxu0 0.0
    %542 = vmatprep.subr.mxu0 0.0
    %543 = vmatpush1.msra.mxu0 0.0
    %544 = vmatprep.subr.mxu0 0.0
    %545 = vmatpush1.msra.mxu0 0.0
    %546 = vmatprep.subr.mxu0 0.0
    %547 = vmatpush1.msra.mxu0 0.0
    %548 = vmatprep.subr.mxu0 0.0
    %549 = vmatpush1.msra.mxu0 0.0
    %550 = vmatprep.subr.mxu0 0.0
    %551 = vmatpush1.msra.mxu0 0.0
    %552 = vmatprep.subr.mxu0 0.0
    %553 = vmatpush1.msra.mxu0 0.0
    %554 = vmatprep.subr.mxu0 0.0
    %555 = vmatpush1.msra.mxu0 0.0
    %556 = vmatprep.mubr.f32.mxu0 0.0
    %557 = vmatmul.mubr.f32.gmra.mrb[0].mxu0 %v490
    %v558 = vpop.f32.mrb[0].mxu0
    %v559 = vadd.f32 %v340, %v558
    %v560 = vpop.f32.mrb[0].mxu0
    %561 = vdwg.mxu0
    %v563 = vsel %vm342, %v87, 0
    %565 = vmatprep.subr.mxu0 0.0
    %566 = vmatpush1.msra.mxu0 %v203
    %567 = vmatprep.subr.mxu0 0.0
    %568 = vmatpush1.msra.mxu0 %v312
    %569 = vmatprep.subr.mxu0 0.0
    %570 = vmatpush1.msra.mxu0 0.0
    %571 = vmatprep.subr.mxu0 0.0
    %572 = vmatpush1.msra.mxu0 0.0
    %573 = vmatprep.subr.mxu0 0.0
    %574 = vmatpush1.msra.mxu0 0.0
    %575 = vmatprep.subr.mxu0 0.0
    %576 = vmatpush1.msra.mxu0 0.0
    %577 = vmatprep.subr.mxu0 0.0
    %578 = vmatpush1.msra.mxu0 0.0
    %579 = vmatprep.subr.mxu0 0.0
    %580 = vmatpush1.msra.mxu0 0.0
    %581 = vmatprep.subr.mxu0 0.0
    %582 = vmatpush1.msra.mxu0 0.0
    %583 = vmatprep.subr.mxu0 0.0
    %584 = vmatpush1.msra.mxu0 0.0
    %585 = vmatprep.subr.mxu0 0.0
    %586 = vmatpush1.msra.mxu0 0.0
    %587 = vmatprep.subr.mxu0 0.0
    %588 = vmatpush1.msra.mxu0 0.0
    %589 = vmatprep.subr.mxu0 0.0
    %590 = vmatpush1.msra.mxu0 0.0
    %591 = vmatprep.subr.mxu0 0.0
    %592 = vmatpush1.msra.mxu0 0.0
    %593 = vmatprep.subr.mxu0 0.0
    %594 = vmatpush1.msra.mxu0 0.0
    %595 = vmatprep.subr.mxu0 0.0
    %596 = vmatpush1.msra.mxu0 0.0
    %597 = vmatprep.subr.mxu0 0.0
    %598 = vmatpush1.msra.mxu0 0.0
    %599 = vmatprep.subr.mxu0 0.0
    %600 = vmatpush1.msra.mxu0 0.0
    %601 = vmatprep.subr.mxu0 0.0
    %602 = vmatpush1.msra.mxu0 0.0
    %603 = vmatprep.subr.mxu0 0.0
    %604 = vmatpush1.msra.mxu0 0.0
    %605 = vmatprep.subr.mxu0 0.0
    %606 = vmatpush1.msra.mxu0 0.0
    %607 = vmatprep.subr.mxu0 0.0
    %608 = vmatpush1.msra.mxu0 0.0
    %609 = vmatprep.subr.mxu0 0.0
    %610 = vmatpush1.msra.mxu0 0.0
    %611 = vmatprep.subr.mxu0 0.0
    %612 = vmatpush1.msra.mxu0 0.0
    %613 = vmatprep.subr.mxu0 0.0
    %614 = vmatpush1.msra.mxu0 0.0
    %615 = vmatprep.subr.mxu0 0.0
    %616 = vmatpush1.msra.mxu0 0.0
    %617 = vmatprep.subr.mxu0 0.0
    %618 = vmatpush1.msra.mxu0 0.0
    %619 = vmatprep.subr.mxu0 0.0
    %620 = vmatpush1.msra.mxu0 0.0
    %621 = vmatprep.subr.mxu0 0.0
    %622 = vmatpush1.msra.mxu0 0.0
    %623 = vmatprep.subr.mxu0 0.0
    %624 = vmatpush1.msra.mxu0 0.0
    %625 = vmatprep.subr.mxu0 0.0
    %626 = vmatpush1.msra.mxu0 0.0
    %627 = vmatprep.subr.mxu0 0.0
    %628 = vmatpush1.msra.mxu0 0.0
    %629 = vmatprep.mubr.f32.mxu0 0.0
    %630 = vmatmul.mubr.f32.gmra.mrb[0].mxu0 %v563
    %v631 = vpop.f32.mrb[0].mxu0
    %v632 = vadd.f32 %v340, %v631
    %v633 = vpop.f32.mrb[0].mxu0
    %634 = vdwg.mxu0
    %v636 = vsel %vm342, %v88, 0
    %638 = vmatprep.subr.mxu0 0.0
    %639 = vmatpush1.msra.mxu0 %v208
    %640 = vmatprep.subr.mxu0 0.0
    %641 = vmatpush1.msra.mxu0 %v317
    %642 = vmatprep.subr.mxu0 0.0
    %643 = vmatpush1.msra.mxu0 0.0
    %644 = vmatprep.subr.mxu0 0.0
    %645 = vmatpush1.msra.mxu0 0.0
    %646 = vmatprep.subr.mxu0 0.0
    %647 = vmatpush1.msra.mxu0 0.0
    %648 = vmatprep.subr.mxu0 0.0
    %649 = vmatpush1.msra.mxu0 0.0
    %650 = vmatprep.subr.mxu0 0.0
    %651 = vmatpush1.msra.mxu0 0.0
    %652 = vmatprep.subr.mxu0 0.0
    %653 = vmatpush1.msra.mxu0 0.0
    %654 = vmatprep.subr.mxu0 0.0
    %655 = vmatpush1.msra.mxu0 0.0
    %656 = vmatprep.subr.mxu0 0.0
    %657 = vmatpush1.msra.mxu0 0.0
    %658 = vmatprep.subr.mxu0 0.0
    %659 = vmatpush1.msra.mxu0 0.0
    %660 = vmatprep.subr.mxu0 0.0
    %661 = vmatpush1.msra.mxu0 0.0
    %662 = vmatprep.subr.mxu0 0.0
    %663 = vmatpush1.msra.mxu0 0.0
    %664 = vmatprep.subr.mxu0 0.0
    %665 = vmatpush1.msra.mxu0 0.0
    %666 = vmatprep.subr.mxu0 0.0
    %667 = vmatpush1.msra.mxu0 0.0
    %668 = vmatprep.subr.mxu0 0.0
    %669 = vmatpush1.msra.mxu0 0.0
    %670 = vmatprep.subr.mxu0 0.0
    %671 = vmatpush1.msra.mxu0 0.0
    %672 = vmatprep.subr.mxu0 0.0
    %673 = vmatpush1.msra.mxu0 0.0
    %674 = vmatprep.subr.mxu0 0.0
    %675 = vmatpush1.msra.mxu0 0.0
    %676 = vmatprep.subr.mxu0 0.0
    %677 = vmatpush1.msra.mxu0 0.0
    %678 = vmatprep.subr.mxu0 0.0
    %679 = vmatpush1.msra.mxu0 0.0
    %680 = vmatprep.subr.mxu0 0.0
    %681 = vmatpush1.msra.mxu0 0.0
    %682 = vmatprep.subr.mxu0 0.0
    %683 = vmatpush1.msra.mxu0 0.0
    %684 = vmatprep.subr.mxu0 0.0
    %685 = vmatpush1.msra.mxu0 0.0
    %686 = vmatprep.subr.mxu0 0.0
    %687 = vmatpush1.msra.mxu0 0.0
    %688 = vmatprep.subr.mxu0 0.0
    %689 = vmatpush1.msra.mxu0 0.0
    %690 = vmatprep.subr.mxu0 0.0
    %691 = vmatpush1.msra.mxu0 0.0
    %692 = vmatprep.subr.mxu0 0.0
    %693 = vmatpush1.msra.mxu0 0.0
    %694 = vmatprep.subr.mxu0 0.0
    %695 = vmatpush1.msra.mxu0 0.0
    %696 = vmatprep.subr.mxu0 0.0
    %697 = vmatpush1.msra.mxu0 0.0
    %698 = vmatprep.subr.mxu0 0.0
    %699 = vmatpush1.msra.mxu0 0.0
    %700 = vmatprep.subr.mxu0 0.0
    %701 = vmatpush1.msra.mxu0 0.0
    %702 = vmatprep.mubr.f32.mxu0 0.0
    %703 = vmatmul.mubr.f32.gmra.mrb[0].mxu0 %v636
    %v704 = vpop.f32.mrb[0].mxu0
    %v705 = vadd.f32 %v340, %v704
    %v706 = vpop.f32.mrb[0].mxu0
    %707 = vdwg.mxu0
    %v709 = vsel %vm342, %v89, 0
    %711 = vmatprep.subr.mxu0 0.0
    %712 = vmatpush1.msra.mxu0 %v213
    %713 = vmatprep.subr.mxu0 0.0
    %714 = vmatpush1.msra.mxu0 %v322
    %715 = vmatprep.subr.mxu0 0.0
    %716 = vmatpush1.msra.mxu0 0.0
    %717 = vmatprep.subr.mxu0 0.0
    %718 = vmatpush1.msra.mxu0 0.0
    %719 = vmatprep.subr.mxu0 0.0
    %720 = vmatpush1.msra.mxu0 0.0
    %721 = vmatprep.subr.mxu0 0.0
    %722 = vmatpush1.msra.mxu0 0.0
    %723 = vmatprep.subr.mxu0 0.0
    %724 = vmatpush1.msra.mxu0 0.0
    %725 = vmatprep.subr.mxu0 0.0
    %726 = vmatpush1.msra.mxu0 0.0
    %727 = vmatprep.subr.mxu0 0.0
    %728 = vmatpush1.msra.mxu0 0.0
    %729 = vmatprep.subr.mxu0 0.0
    %730 = vmatpush1.msra.mxu0 0.0
    %731 = vmatprep.subr.mxu0 0.0
    %732 = vmatpush1.msra.mxu0 0.0
    %733 = vmatprep.subr.mxu0 0.0
    %734 = vmatpush1.msra.mxu0 0.0
    %735 = vmatprep.subr.mxu0 0.0
    %736 = vmatpush1.msra.mxu0 0.0
    %737 = vmatprep.subr.mxu0 0.0
    %738 = vmatpush1.msra.mxu0 0.0
    %739 = vmatprep.subr.mxu0 0.0
    %740 = vmatpush1.msra.mxu0 0.0
    %741 = vmatprep.subr.mxu0 0.0
    %742 = vmatpush1.msra.mxu0 0.0
    %743 = vmatprep.subr.mxu0 0.0
    %744 = vmatpush1.msra.mxu0 0.0
    %745 = vmatprep.subr.mxu0 0.0
    %746 = vmatpush1.msra.mxu0 0.0
    %747 = vmatprep.subr.mxu0 0.0
    %748 = vmatpush1.msra.mxu0 0.0
    %749 = vmatprep.subr.mxu0 0.0
    %750 = vmatpush1.msra.mxu0 0.0
    %751 = vmatprep.subr.mxu0 0.0
    %752 = vmatpush1.msra.mxu0 0.0
    %753 = vmatprep.subr.mxu0 0.0
    %754 = vmatpush1.msra.mxu0 0.0
    %755 = vmatprep.subr.mxu0 0.0
    %756 = vmatpush1.msra.mxu0 0.0
    %757 = vmatprep.subr.mxu0 0.0
    %758 = vmatpush1.msra.mxu0 0.0
    %759 = vmatprep.subr.mxu0 0.0
    %760 = vmatpush1.msra.mxu0 0.0
    %761 = vmatprep.subr.mxu0 0.0
    %762 = vmatpush1.msra.mxu0 0.0
    %763 = vmatprep.subr.mxu0 0.0
    %764 = vmatpush1.msra.mxu0 0.0
    %765 = vmatprep.subr.mxu0 0.0
    %766 = vmatpush1.msra.mxu0 0.0
    %767 = vmatprep.subr.mxu0 0.0
    %768 = vmatpush1.msra.mxu0 0.0
    %769 = vmatprep.subr.mxu0 0.0
    %770 = vmatpush1.msra.mxu0 0.0
    %771 = vmatprep.subr.mxu0 0.0
    %772 = vmatpush1.msra.mxu0 0.0
    %773 = vmatprep.subr.mxu0 0.0
    %774 = vmatpush1.msra.mxu0 0.0
    %775 = vmatprep.mubr.f32.mxu0 0.0
    %776 = vmatmul.mubr.f32.gmra.mrb[0].mxu0 %v709
    %v777 = vpop.f32.mrb[0].mxu0
    %v778 = vadd.f32 %v340, %v777
    %v779 = vpop.f32.mrb[0].mxu0
    %780 = vdwg.mxu0
    %v782 = vsel %vm342, %v90, 0
    %784 = vmatprep.subr.mxu0 0.0
    %785 = vmatpush1.msra.mxu0 %v218
    %786 = vmatprep.subr.mxu0 0.0
    %787 = vmatpush1.msra.mxu0 %v327
    %788 = vmatprep.subr.mxu0 0.0
    %789 = vmatpush1.msra.mxu0 0.0
    %790 = vmatprep.subr.mxu0 0.0
    %791 = vmatpush1.msra.mxu0 0.0
    %792 = vmatprep.subr.mxu0 0.0
    %793 = vmatpush1.msra.mxu0 0.0
    %794 = vmatprep.subr.mxu0 0.0
    %795 = vmatpush1.msra.mxu0 0.0
    %796 = vmatprep.subr.mxu0 0.0
    %797 = vmatpush1.msra.mxu0 0.0
    %798 = vmatprep.subr.mxu0 0.0
    %799 = vmatpush1.msra.mxu0 0.0
    %800 = vmatprep.subr.mxu0 0.0
    %801 = vmatpush1.msra.mxu0 0.0
    %802 = vmatprep.subr.mxu0 0.0
    %803 = vmatpush1.msra.mxu0 0.0
    %804 = vmatprep.subr.mxu0 0.0
    %805 = vmatpush1.msra.mxu0 0.0
    %806 = vmatprep.subr.mxu0 0.0
    %807 = vmatpush1.msra.mxu0 0.0
    %808 = vmatprep.subr.mxu0 0.0
    %809 = vmatpush1.msra.mxu0 0.0
    %810 = vmatprep.subr.mxu0 0.0
    %811 = vmatpush1.msra.mxu0 0.0
    %812 = vmatprep.subr.mxu0 0.0
    %813 = vmatpush1.msra.mxu0 0.0
    %814 = vmatprep.subr.mxu0 0.0
    %815 = vmatpush1.msra.mxu0 0.0
    %816 = vmatprep.subr.mxu0 0.0
    %817 = vmatpush1.msra.mxu0 0.0
    %818 = vmatprep.subr.mxu0 0.0
    %819 = vmatpush1.msra.mxu0 0.0
    %820 = vmatprep.subr.mxu0 0.0
    %821 = vmatpush1.msra.mxu0 0.0
    %822 = vmatprep.subr.mxu0 0.0
    %823 = vmatpush1.msra.mxu0 0.0
    %824 = vmatprep.subr.mxu0 0.0
    %825 = vmatpush1.msra.mxu0 0.0
    %826 = vmatprep.subr.mxu0 0.0
    %827 = vmatpush1.msra.mxu0 0.0
    %828 = vmatprep.subr.mxu0 0.0
    %829 = vmatpush1.msra.mxu0 0.0
    %830 = vmatprep.subr.mxu0 0.0
    %831 = vmatpush1.msra.mxu0 0.0
    %832 = vmatprep.subr.mxu0 0.0
    %833 = vmatpush1.msra.mxu0 0.0
    %834 = vmatprep.subr.mxu0 0.0
    %835 = vmatpush1.msra.mxu0 0.0
    %836 = vmatprep.subr.mxu0 0.0
    %837 = vmatpush1.msra.mxu0 0.0
    %838 = vmatprep.subr.mxu0 0.0
    %839 = vmatpush1.msra.mxu0 0.0
    %840 = vmatprep.subr.mxu0 0.0
    %841 = vmatpush1.msra.mxu0 0.0
    %842 = vmatprep.subr.mxu0 0.0
    %843 = vmatpush1.msra.mxu0 0.0
    %844 = vmatprep.subr.mxu0 0.0
    %845 = vmatpush1.msra.mxu0 0.0
    %846 = vmatprep.subr.mxu0 0.0
    %847 = vmatpush1.msra.mxu0 0.0
    %848 = vmatprep.mubr.f32.mxu0 0.0
    %849 = vmatmul.mubr.f32.gmra.mrb[0].mxu0 %v782
    %v850 = vpop.f32.mrb[0].mxu0
    %v851 = vadd.f32 %v340, %v850
    %v852 = vpop.f32.mrb[0].mxu0
    %853 = vdwg.mxu0
    %v855 = vsel %vm342, %v91, 0
    %857 = vmatprep.subr.mxu0 0.0
    %858 = vmatpush1.msra.mxu0 %v223
    %859 = vmatprep.subr.mxu0 0.0
    %860 = vmatpush1.msra.mxu0 %v332
    %861 = vmatprep.subr.mxu0 0.0
    %862 = vmatpush1.msra.mxu0 0.0
    %863 = vmatprep.subr.mxu0 0.0
    %864 = vmatpush1.msra.mxu0 0.0
    %865 = vmatprep.subr.mxu0 0.0
    %866 = vmatpush1.msra.mxu0 0.0
    %867 = vmatprep.subr.mxu0 0.0
    %868 = vmatpush1.msra.mxu0 0.0
    %869 = vmatprep.subr.mxu0 0.0
    %870 = vmatpush1.msra.mxu0 0.0
    %871 = vmatprep.subr.mxu0 0.0
    %872 = vmatpush1.msra.mxu0 0.0
    %873 = vmatprep.subr.mxu0 0.0
    %874 = vmatpush1.msra.mxu0 0.0
    %875 = vmatprep.subr.mxu0 0.0
    %876 = vmatpush1.msra.mxu0 0.0
    %877 = vmatprep.subr.mxu0 0.0
    %878 = vmatpush1.msra.mxu0 0.0
    %879 = vmatprep.subr.mxu0 0.0
    %880 = vmatpush1.msra.mxu0 0.0
    %881 = vmatprep.subr.mxu0 0.0
    %882 = vmatpush1.msra.mxu0 0.0
    %883 = vmatprep.subr.mxu0 0.0
    %884 = vmatpush1.msra.mxu0 0.0
    %885 = vmatprep.subr.mxu0 0.0
    %886 = vmatpush1.msra.mxu0 0.0
    %887 = vmatprep.subr.mxu0 0.0
    %888 = vmatpush1.msra.mxu0 0.0
    %889 = vmatprep.subr.mxu0 0.0
    %890 = vmatpush1.msra.mxu0 0.0
    %891 = vmatprep.subr.mxu0 0.0
    %892 = vmatpush1.msra.mxu0 0.0
    %893 = vmatprep.subr.mxu0 0.0
    %894 = vmatpush1.msra.mxu0 0.0
    %895 = vmatprep.subr.mxu0 0.0
    %896 = vmatpush1.msra.mxu0 0.0
    %897 = vmatprep.subr.mxu0 0.0
    %898 = vmatpush1.msra.mxu0 0.0
    %899 = vmatprep.subr.mxu0 0.0
    %900 = vmatpush1.msra.mxu0 0.0
    %901 = vmatprep.subr.mxu0 0.0
    %902 = vmatpush1.msra.mxu0 0.0
    %903 = vmatprep.subr.mxu0 0.0
    %904 = vmatpush1.msra.mxu0 0.0
    %905 = vmatprep.subr.mxu0 0.0
    %906 = vmatpush1.msra.mxu0 0.0
    %907 = vmatprep.subr.mxu0 0.0
    %908 = vmatpush1.msra.mxu0 0.0
    %909 = vmatprep.subr.mxu0 0.0
    %910 = vmatpush1.msra.mxu0 0.0
    %911 = vmatprep.subr.mxu0 0.0
    %912 = vmatpush1.msra.mxu0 0.0
    %913 = vmatprep.subr.mxu0 0.0
    %914 = vmatpush1.msra.mxu0 0.0
    %915 = vmatprep.subr.mxu0 0.0
    %916 = vmatpush1.msra.mxu0 0.0
    %917 = vmatprep.subr.mxu0 0.0
    %918 = vmatpush1.msra.mxu0 0.0
    %919 = vmatprep.subr.mxu0 0.0
    %920 = vmatpush1.msra.mxu0 0.0
    %921 = vmatprep.mubr.f32.mxu0 0.0
    %922 = vmatmul.mubr.f32.gmra.mrb[0].mxu0 %v855
    %v923 = vpop.f32.mrb[0].mxu0
    %v924 = vadd.f32 %v340, %v923
    %v925 = vpop.f32.mrb[0].mxu0
    %926 = vdwg.mxu0
    %927 = vst.msk [vmem:[#allocation10] sm:$0xff] %vm96, %v413
    %928 = vst.msk [vmem:[#allocation10 + $0x8] sm:$0xff] %vm96, %v486
    %929 = vst.msk [vmem:[#allocation10 + $0x10] sm:$0xff] %vm96, %v559
    %930 = vst.msk [vmem:[#allocation10 + $0x18] sm:$0xff] %vm96, %v632
    %931 = vst.msk [vmem:[#allocation10 + $0x20] sm:$0xff] %vm96, %v705
    %932 = vst.msk [vmem:[#allocation10 + $0x28] sm:$0xff] %vm96, %v778
    %933 = vst.msk [vmem:[#allocation10 + $0x30] sm:$0xff] %vm96, %v851
    %934 = vst.msk [vmem:[#allocation10 + $0x38] sm:$0xff] %vm96, %v924
    // Predicated region
    $region38: #{tpu_custom_call.1} parent=1 // pred_check
      _
    $region39: #{tpu_custom_call.1} parent=1 // pred_check_branch
      %936 = sbr.rel (0) target = $region41
    $region40: #{tpu_custom_call.1} parent=1 // pred_region
      %s938 = ssub.s32 1024, 1024
      %939 = vsyncadd [#allocation4], %s938
      %s940 = sshll.u32 [#allocation10], 4
      %s941 = int_to_ptr.vmem [resolvable:$true] %s940
      %946 = dma.vmem_to_hbm [thread:$0]  %s941, 1024, %s5, [#allocation4], 128, 128, 8
    $region41: #{tpu_custom_call.1} parent=1 // pred_fallthru
      _
    // Predicated region
    $region42: #{tpu_custom_call.1} parent=1 // pred_check
      _
    $region43: #{tpu_custom_call.1} parent=1 // pred_check_branch
      %948 = sbr.rel (0) target = $region45
    $region44: #{tpu_custom_call.1} parent=1 // pred_region
      %949 = dma.done [#allocation4], 1024
    $region45: #{tpu_custom_call.1} parent=1 // pred_fallthru
      _
    %950 = vsyncpa [#allocation3], 1
    %951 = vsyncpa [#allocation6], 1
    %952 = vsyncpa [#allocation9], 1
    %953 = vsyncpa [#allocation4], 1

</llo_original>
